<compile_context>
chip_gen: v5e
topology: v5e:2x2
jax: 0.10.0
libtpu: 0.0.40
codegen_flags: <defaults>
</compile_context>

<pallas_src>
import math
import numpy as np
import jax
import jax.numpy as jnp
from jax.experimental import pallas as pl
from jax.experimental.pallas import tpu as pltpu


def _round_up(x, m):
    return ((x + m - 1) // m) * m


def _pick_vmem_limit():
    cap = 64 * 1024 * 1024
    try:
        cap = int(pltpu.get_tpu_info().vmem_capacity_bytes)
    except Exception:
        pass
    return int(min(cap * 3 // 4, 96 * 1024 * 1024))


def _pick_row_tile(n_out, row_tile):
    # >=2 row tiles when n_out allows it (keeps both v7x TensorCores busy) and 16-aligned so
    # the bf16 LHS keeps its packed sublane layout.
    row_tile = _round_up(max(row_tile, 16), 16)
    half = _round_up(max((n_out + 1) // 2, 16), 16)
    return max(16, min(row_tile, half, _round_up(n_out, 16)))


def _pick_k_tile(kc_pad, k_tile):
    # Largest 128-multiple <= k_tile that divides kc_pad (kc_pad is a 128-multiple by
    # construction), defaulting towards 512 (multiple of the 256-wide v6e/v7x MXU).
    t = min(_round_up(max(k_tile, 128), 128), kc_pad)
    while kc_pad % t != 0:
        t -= 128
    return t


# ------------------------------ Pallas kernel ------------------------------ #

def _im2col_matmul_kernel(cols_ref, w_ref, b_ref, o_ref, acc_ref):
    # cols_ref: (TP, TK)      bf16  im2col-gathered features for TP output voxels, K-chunk
    # w_ref:    (TK, CO_pad)  bf16  flattened weight chunk
    # b_ref:    (1, CO_pad)   f32   bias (fused into the epilogue)
    # o_ref:    (TP, CO_pad)  out dtype (feats.dtype)
    # acc_ref:  (TP, CO_pad)  f32   accumulator scratch
    k = pl.program_id(1)

    @pl.when(k == 0)
    def _():
        acc_ref[...] = jnp.zeros_like(acc_ref)

    acc_ref[...] += jnp.dot(cols_ref[...], w_ref[...],
                            preferred_element_type=jnp.float32)

    @pl.when(k == pl.num_programs(1) - 1)
    def _():
        o_ref[...] = (acc_ref[...] + b_ref[...]).astype(o_ref.dtype)


def im2col_matmul(cols, w_mat, b_row, row_tile, k_tile, out_dtype):
    """cols [N_pad, KC_pad] bf16, w_mat [KC_pad, CO_pad] bf16, b_row [1, CO_pad] f32."""
    n_pad, kc_pad = cols.shape
    co_pad = w_mat.shape[1]
    grid = (n_pad // row_tile, kc_pad // k_tile)
    out_itemsize = jnp.dtype(out_dtype).itemsize
    cost = pl.CostEstimate(
        flops=2 * n_pad * kc_pad * co_pad,
        transcendentals=0,
        bytes_accessed=(cols.size * 2                     # bf16 cols streamed once
                        + w_mat.size * 2 * grid[0]        # weight re-streamed per row tile
                        + b_row.size * 4
                        + n_pad * co_pad * out_itemsize),
    )
    return pl.pallas_call(
        _im2col_matmul_kernel,
        out_shape=jax.ShapeDtypeStruct((n_pad, co_pad), out_dtype),
        grid_spec=pltpu.PrefetchScalarGridSpec(
            num_scalar_prefetch=0,
            grid=grid,
            in_specs=[
                pl.BlockSpec((row_tile, k_tile), lambda i, k: (i, k)),
                pl.BlockSpec((k_tile, co_pad), lambda i, k: (k, 0)),
                pl.BlockSpec((1, co_pad), lambda i, k: (0, 0)),   # bias stays resident
            ],
            out_specs=pl.BlockSpec((row_tile, co_pad), lambda i, k: (i, 0)),
            scratch_shapes=[pltpu.VMEM((row_tile, co_pad), jnp.float32)],
        ),
        compiler_params=pltpu.CompilerParams(
            dimension_semantics=("parallel", "arbitrary"),  # row tiles shard across TCs (v7x)
            vmem_limit_bytes=_pick_vmem_limit(),
        ),
        cost_estimate=cost,
    )(cols, w_mat, b_row)


# ---------------------------- sparse conv compute --------------------------- #

def sparse_inverse_conv_apply(feats, w_mat, b_row, gather_idx, n_out, *,
                              c_in, c_in_pad, c_out, k3, k3_pad,
                              row_tile=512, k_tile=512):
    """feats [N_in, C_in]; w_mat [K3_pad*C_in_pad, CO_pad] bf16; b_row [1, CO_pad] f32;
    gather_idx [N_out, K3] int32 (entries == N_in point at an appended all-zero row)."""
    n_in = feats.shape[0]
    kc_pad, co_pad = w_mat.shape
    out_dtype = feats.dtype

    tp = _pick_row_tile(n_out, row_tile)
    n_pad = _round_up(n_out, tp)
    tk = _pick_k_tile(kc_pad, k_tile)

    # Pad the rulebook (cheap int32) instead of the gathered cols matrix: extra rows / kernel
    # offsets point at the zero feature row, so the gather lands in its final padded layout
    # and no extra full-size jnp.pad pass over the dominant tensor is needed.
    gidx = jnp.pad(gather_idx, ((0, n_pad - n_out), (0, k3_pad - k3)),
                   constant_values=n_in)

    # feats + appended zero row, channel-padded, bf16 (single cheap pass over the small tensor)
    feats_z = jnp.zeros((n_in + 1, c_in_pad), jnp.bfloat16)
    feats_z = feats_z.at[:n_in, :c_in].set(feats.astype(jnp.bfloat16))

    # im2col gather: one row per output voxel, K3_pad*C_in_pad contraction (zeros elsewhere).
    # TODO(synk): moving this gather in-kernel (scalar-prefetched rulebook + per-row dynamic
    #             gather from VMEM-resident feats) would remove the K3-duplicated HBM tensor
    #             entirely, but Mosaic has no reliable arbitrary-row sublane gather lowering.
    cols = feats_z[gidx].reshape(n_pad, kc_pad)

    out_pad = im2col_matmul(cols, w_mat, b_row, tp, tk, out_dtype)   # [N_pad, CO_pad]
    return out_pad[:n_out, :c_out]


# --------------------------- SparseTensor / module --------------------------- #

class SparseTensor:
    def __init__(self, feats, coords, shape, layout=None, scale=(1, 1, 1), spatial_cache=None):
        self.feats = feats
        self.coords = coords
        self.shape = shape
        self.layout = layout
        self._scale = scale
        self._spatial_cache = spatial_cache if spatial_cache is not None else {}

    def GetSpatialCache(self, key):
        return self._spatial_cache[key]


class SparseInverseConv3d:
    def __init__(self, in_channels, out_channels, kernel_size, stride=1, dilation=1,
                 bias=True, indice_key=None, row_tile=512, k_tile=512, *, key):
        self.in_channels = in_channels
        self.out_channels = out_channels
        self.kernel_size = kernel_size
        self.stride = tuple(stride) if isinstance(stride, (list, tuple)) else (stride,) * 3
        self.dilation = dilation
        self.indice_key = indice_key
        self.row_tile = row_tile
        self.k_tile = k_tile

        k3 = kernel_size ** 3
        self.k3 = k3
        # Padding scheme: pad channels to a sublane multiple, then pad the kernel-offset count
        # so the flattened contraction K3_pad*C_in_pad is a 128 multiple (lane-dense, no
        # post-gather pad pass).  At Trellis sizes (C_in>=128) K3 needs no padding at all.
        self.c_in_pad = _round_up(in_channels, 8)
        self.k3_pad = _round_up(k3, 128 // math.gcd(self.c_in_pad, 128))
        self.kc_pad = self.k3_pad * self.c_in_pad
        self.co_pad = _round_up(out_channels, 128)

        wkey, bkey = jax.random.split(key)
        fan_in = in_channels * k3
        bound = 1.0 / np.sqrt(fan_in)
        # weight: [K^3, C_in, C_out]; deterministic synthetic init
        self.weight = jax.random.uniform(wkey, (k3, in_channels, out_channels),
                                         jnp.float32, -bound, bound)
        self.bias = (jax.random.uniform(bkey, (out_channels,), jnp.float32, -bound, bound)
                     if bias else None)

        # Pre-reshape/pad/cast weight + bias once (not per __call__).
        w_pad = jnp.zeros((self.k3_pad, self.c_in_pad, self.co_pad), jnp.float32)
        w_pad = w_pad.at[:k3, :in_channels, :out_channels].set(self.weight)
        self.w_mat = w_pad.reshape(self.kc_pad, self.co_pad).astype(jnp.bfloat16)
        b = self.bias if self.bias is not None else jnp.zeros((out_channels,), jnp.float32)
        self.b_row = jnp.zeros((1, self.co_pad), jnp.float32).at[0, :out_channels].set(
            b.astype(jnp.float32))

    def __call__(self, x: SparseTensor) -> SparseTensor:
        spatial_changed = any(s != 1 for s in self.stride)
        if spatial_changed:
            cached = x.GetSpatialCache(f'conv_{self.stride}_unsorted_data')
            bwd = x.GetSpatialCache(f'conv_{self.stride}_sort_bwd')
            feats = x.feats[bwd]                    # data.replace_feature(x.feats[bwd])
            gather_idx = cached['rulebook']         # simulated indice_key rulebook (im2col form)
            n_out = cached['num_out']
            out_coords = cached['out_coords']
        else:
            # TODO(synk): spconv's stride-1 path reuses the conv's own indice_key rulebook;
            #             simulated here via a cached identity-resolution rulebook.
            feats = x.feats
            gather_idx = x.GetSpatialCache('identity_rulebook')
            n_out = feats.shape[0]
            out_coords = x.coords

        out_feats = sparse_inverse_conv_apply(
            feats, self.w_mat, self.b_row, gather_idx, n_out,
            c_in=self.in_channels, c_in_pad=self.c_in_pad, c_out=self.out_channels,
            k3=self.k3, k3_pad=self.k3_pad,
            row_tile=self.row_tile, k_tile=self.k_tile)

        new_shape = (x.shape[0], self.out_channels)
        new_layout = None if spatial_changed else x.layout
        new_scale = tuple(s // st for s, st in zip(x._scale, self.stride))
        return SparseTensor(out_feats, out_coords, new_shape, layout=new_layout,
                            scale=new_scale, spatial_cache=x._spatial_cache)


# -------------------- host-side rulebook (indice_key sim) -------------------- #

def forward_output_coords(orig_coords, K, stride, pad, dilation, S):
    """Output coords of the forward SparseConv3d(K, stride, pad) -> inputs of the inverse conv."""
    s_out = (S + 2 * pad - dilation * (K - 1) - 1) // stride + 1
    seen, down = {}, []
    for c in orig_coords:
        b, p = int(c[0]), (int(c[1]), int(c[2]), int(c[3]))
        for kz in range(K):
            for ky in range(K):
                for kx in range(K):
                    off = (kz, ky, kx)
                    d, ok = [], True
                    for t in range(3):
                        num = p[t] + pad - off[t] * dilation
                        if num % stride != 0:
                            ok = False
                            break
                        q = num // stride
                        if q < 0 or q >= s_out:
                            ok = False
                            break
                        d.append(q)
                    if not ok:
                        continue
                    keyc = (b, d[0], d[1], d[2])
                    if keyc not in seen:
                        seen[keyc] = len(down)
                        down.append(keyc)
    return np.asarray(down, dtype=np.int32).reshape(-1, 4)


def build_inverse_gather_idx(orig_coords, down_coords, K, stride, pad, dilation):
    """gather_idx[j, k] = downsampled-input row feeding output voxel j at kernel offset k,
    or N_in (dummy zero row) if no input contributes.  At most one input per (j, k)."""
    down_map = {tuple(int(v) for v in c): i for i, c in enumerate(down_coords)}
    n_out = len(orig_coords)
    n_in = len(down_coords)
    K3 = K ** 3
    gidx = np.full((n_out, K3), n_in, np.int32)
    for j, c in enumerate(orig_coords):
        b, p = int(c[0]), (int(c[1]), int(c[2]), int(c[3]))
        for kz in range(K):
            for ky in range(K):
                for kx in range(K):
                    off = (kz, ky, kx)
                    d, ok = [], True
                    for t in range(3):
                        num = p[t] + pad - off[t] * dilation
                        if num % stride != 0:
                            ok = False
                            break
                        d.append(num // stride)
                    if not ok:
                        continue
                    i = down_map.get((b, d[0], d[1], d[2]))
                    if i is None:
                        continue
                    gidx[j, (kz * K + ky) * K + kx] = i
    return jnp.asarray(gidx)


# --------------------------------- references -------------------------------- #

def reference_inverse_conv_bf16(feats, weight, bias, gather_idx, n_out):
    n_in, c_in = feats.shape
    k3, _, c_out = weight.shape
    feats_z = jnp.concatenate([feats, jnp.zeros((1, c_in), feats.dtype)], 0).astype(jnp.bfloat16)
    cols = feats_z[gather_idx].reshape(n_out, k3 * c_in)
    w = weight.reshape(k3 * c_in, c_out).astype(jnp.bfloat16)
    out = jnp.dot(cols, w, preferred_element_type=jnp.float32)
    if bias is not None:
        out = out + bias
    return out


def reference_inverse_conv_f32(feats, weight, bias, gather_idx, n_out):
    c_in = feats.shape[1]
    feats_z = jnp.concatenate([feats, jnp.zeros((1, c_in), feats.dtype)], 0)
    cols = feats_z[gather_idx]                       # [N_out, K3, C_in]
    out = jnp.einsum('nkc,kcd->nd', cols, weight, preferred_element_type=jnp.float32)
    if bias is not None:
        out = out + bias
    return out


# ------------------------------------ main ----------------------------------- #

if __name__ == "__main__":
    key = jax.random.PRNGKey(0)
    k_coords, k_feats, k_perm, k_conv = jax.random.split(key, 4)

    B, S = 1, 8                  # batch, full-resolution spatial extent
    C_in, C_out, K = 4, 8, 3
    stride, pad, dilation = 2, 1, 1
    N_orig = 200                 # active voxels at full resolution (inverse-conv outputs)

    # deterministic original (full-resolution) active voxels
    flat = np.asarray(jax.random.permutation(k_coords, S * S * S)[:N_orig])
    zz, rem = flat // (S * S), flat % (S * S)
    yy, xx = rem // S, rem % S
    orig_coords = np.stack([np.zeros_like(zz), zz, yy, xx], axis=1).astype(np.int32)

    # simulate the indice_key'd forward SparseConv3d(K=3, stride=2, pad=1) this conv inverts
    down_coords = forward_output_coords(orig_coords, K, stride, pad, dilation, S)
    N_in = down_coords.shape[0]
    gather_idx = build_inverse_gather_idx(orig_coords, down_coords, K, stride, pad, dilation)

    # features: "unsorted" order matches down_coords; x carries a sorted copy + bwd permutation
    feats_unsorted = jax.random.normal(k_feats, (N_in, C_in), jnp.float32)
    fwd = np.asarray(jax.random.permutation(k_perm, N_in))
    bwd = np.argsort(fwd).astype(np.int32)
    feats_sorted = feats_unsorted[jnp.asarray(fwd)]

    stride_t = (stride,) * 3
    spatial_cache = {
        f'conv_{stride_t}_unsorted_data': {
            'rulebook': gather_idx,                  # im2col-form rulebook [N_out, K3]
            'num_out': N_orig,
            'out_coords': jnp.asarray(orig_coords),
        },
        f'conv_{stride_t}_sort_bwd': jnp.asarray(bwd),
    }

    x = SparseTensor(feats_sorted, coords=jnp.asarray(down_coords), shape=(B, C_in),
                     layout=None, scale=(2, 2, 2), spatial_cache=spatial_cache)

    # small tiles so the demo exercises a multi-tile row axis AND a multi-step contraction
    # axis with the accumulator init/finalize path (200 rows -> 2 tiles of 112; KC 256 -> 2x128)
    conv = SparseInverseConv3d(C_in, C_out, K, stride=stride, bias=True,
                               indice_key="down1", row_tile=128, k_tile=128, key=k_conv)
    out = conv(x)
    jax.block_until_ready(out.feats)

    assert out.feats.shape == (N_orig, C_out)
    assert out.feats.dtype == x.feats.dtype
    assert out.shape == (B, C_out)
    assert out._scale == (1, 1, 1)

    # tight check against a reference with identical bf16 casting
    ref_bf16 = reference_inverse_conv_bf16(feats_unsorted, conv.weight, conv.bias,
                                           gather_idx, N_orig)
    np.testing.assert_allclose(np.asarray(out.feats), np.asarray(ref_bf16),
                               rtol=1e-3, atol=1e-3)

    # loose check against full-f32 math (bf16 input rounding is the only difference)
    ref_f32 = reference_inverse_conv_f32(feats_unsorted, conv.weight, conv.bias,
                                         gather_idx, N_orig)
    np.testing.assert_allclose(np.asarray(out.feats), np.asarray(ref_f32),
                               rtol=5e-2, atol=3e-2)

    print("KERNEL_OK")
</pallas_src>

<mosaic_0001>
module attributes {stable_mosaic.version = 11 : i64} {
  func.func @_im2col_matmul_kernel(%arg0: i32, %arg1: i32, %arg2: memref<112x128xbf16, #tpu.memory_space<vmem>>, %arg3: memref<128x128xbf16, #tpu.memory_space<vmem>>, %arg4: memref<1x128xf32, #tpu.memory_space<vmem>>, %arg5: memref<112x128xf32, #tpu.memory_space<vmem>>, %arg6: memref<112x128xf32, #tpu.memory_space<vmem>>) attributes {dimension_semantics = [#tpu.dimension_semantics<parallel>, #tpu.dimension_semantics<arbitrary>], iteration_bounds = array<i64: 2, 2>, scalar_prefetch = 0 : i64, scratch_operands = 1 : i64, tpu.core_type = #tpu.core_type<tc>, window_params = [{transform_indices = @transform_0, window_bounds = array<i64: 112, 128>}, {transform_indices = @transform_1, window_bounds = array<i64: 128, 128>}, {pipeline_mode = #tpu.pipeline_mode<synchronous>, transform_indices = @transform_2, window_bounds = array<i64: 1, 128>}, {transform_indices = @transform_3, window_bounds = array<i64: 112, 128>}]} {
    %c0_i32 = arith.constant 0 : i32
    %0 = arith.cmpi eq, %arg1, %c0_i32 : i32
    %1 = arith.extui %0 : i1 to i32
    %c0_i32_0 = arith.constant 0 : i32
    %2 = arith.cmpi ne, %1, %c0_i32_0 : i32
    scf.if %2 {
      %cst_9 = arith.constant 0.000000e+00 : f32
      %12 = vector.broadcast %cst_9 : f32 to vector<112x128xf32>
      %c0_10 = arith.constant 0 : index
      %c0_11 = arith.constant 0 : index
      %13 = vector.load %arg6[%c0_10, %c0_11] : memref<112x128xf32, #tpu.memory_space<vmem>>, vector<112x128xf32>
      tpu.vector_store %arg6[%c0_10, %c0_11], %12 {strides = array<i32>} : memref<112x128xf32, #tpu.memory_space<vmem>>, vector<112x128xf32>,
    } else {
    }
    %c0 = arith.constant 0 : index
    %c0_1 = arith.constant 0 : index
    %3 = vector.load %arg6[%c0, %c0_1] : memref<112x128xf32, #tpu.memory_space<vmem>>, vector<112x128xf32>
    %c0_2 = arith.constant 0 : index
    %c0_3 = arith.constant 0 : index
    %4 = vector.load %arg2[%c0_2, %c0_3] : memref<112x128xbf16, #tpu.memory_space<vmem>>, vector<112x128xbf16>
    %c0_4 = arith.constant 0 : index
    %c0_5 = arith.constant 0 : index
    %5 = vector.load %arg3[%c0_4, %c0_5] : memref<128x128xbf16, #tpu.memory_space<vmem>>, vector<128x128xbf16>
    %cst = arith.constant dense<0.000000e+00> : vector<112x128xf32>
    %6 = tpu.matmul %4, %5, %cst {dimension_numbers = #tpu.dot_dimension_numbers<[1], [0], [0], [1], [0, 0, 1, 1], [], []>} : vector<112x128xbf16>, vector<128x128xbf16>, vector<112x128xf32> -> vector<112x128xf32>
    %7 = arith.addf %3, %6 : vector<112x128xf32>
    %c0_6 = arith.constant 0 : index
    %c0_7 = arith.constant 0 : index
    %8 = vector.load %arg6[%c0_6, %c0_7] : memref<112x128xf32, #tpu.memory_space<vmem>>, vector<112x128xf32>
    tpu.vector_store %arg6[%c0_6, %c0_7], %7 {strides = array<i32>} : memref<112x128xf32, #tpu.memory_space<vmem>>, vector<112x128xf32>,
    %c1_i32 = arith.constant 1 : i32
    %9 = arith.cmpi eq, %arg1, %c1_i32 : i32
    %10 = arith.extui %9 : i1 to i32
    %c0_i32_8 = arith.constant 0 : i32
    %11 = arith.cmpi ne, %10, %c0_i32_8 : i32
    scf.if %11 {
      %c0_9 = arith.constant 0 : index
      %c0_10 = arith.constant 0 : index
      %12 = vector.load %arg6[%c0_9, %c0_10] : memref<112x128xf32, #tpu.memory_space<vmem>>, vector<112x128xf32>
      %c0_11 = arith.constant 0 : index
      %c0_12 = arith.constant 0 : index
      %13 = vector.load %arg4[%c0_11, %c0_12] : memref<1x128xf32, #tpu.memory_space<vmem>>, vector<1x128xf32>
      %14 = vector.broadcast %13 : vector<1x128xf32> to vector<112x128xf32>
      %15 = arith.addf %12, %14 : vector<112x128xf32>
      %c0_13 = arith.constant 0 : index
      %c0_14 = arith.constant 0 : index
      %16 = vector.load %arg5[%c0_13, %c0_14] : memref<112x128xf32, #tpu.memory_space<vmem>>, vector<112x128xf32>
      tpu.vector_store %arg5[%c0_13, %c0_14], %15 {strides = array<i32>} : memref<112x128xf32, #tpu.memory_space<vmem>>, vector<112x128xf32>,
    } else {
    }
    return
  }
  func.func @transform_0(%arg0: i32, %arg1: i32) -> (i32, i32) {
    %c0_i32 = arith.constant 0 : i32
    return %arg0, %arg1 : i32, i32
  }
  func.func @transform_1(%arg0: i32, %arg1: i32) -> (i32, i32) {
    %c0_i32 = arith.constant 0 : i32
    %c0_i32_0 = arith.constant 0 : i32
    return %arg1, %c0_i32 : i32, i32
  }
  func.func @transform_2(%arg0: i32, %arg1: i32) -> (i32, i32) {
    %c0_i32 = arith.constant 0 : i32
    %c0_i32_0 = arith.constant 0 : i32
    %c0_i32_1 = arith.constant 0 : i32
    return %c0_i32, %c0_i32_0 : i32, i32
  }
  func.func @transform_3(%arg0: i32, %arg1: i32) -> (i32, i32) {
    %c0_i32 = arith.constant 0 : i32
    %c0_i32_0 = arith.constant 0 : i32
    return %arg0, %c0_i32 : i32, i32
  }
}

</mosaic_0001>

<llo_original>
// kernel: tpu_custom_call.1
$region0: #{tpu_custom_call.1}
  #allocation0 [shape = 'u32[]', space=smem, size = 0x4, offset = 0x4, fixed_abs, tag = 'smem constant byte address 0x4 - core index']
  #allocation1 [shape = 'u32[72,128]{1,0:T(1,128)}', space=vmem, size = 0x9000, scoped, tag = 'internal scratch']
  #allocation2 [shape = 'f32[112,128]{1,0:T(8,128)}', space=vmem, size = 0xe000, scoped, tag = 'scratch operand']
  %s0 = inlined_call_operand.hbm [shape: bf16[224,256], index: 0, kind: input, shape index: {}]
  %s1 = inlined_call_operand.hbm [shape: bf16[256,128], index: 1, kind: input, shape index: {}]
  %s2 = inlined_call_operand.vmem [shape: f32[1,128], index: 2, kind: input, shape index: {}]
  %s3 = inlined_call_operand.hbm [shape: f32[224,128], index: 3, kind: output, shape index: {}]
  %s4 = sld [smem:[#allocation0]]
  $region61: #{tpu_custom_call.1} parent=0
    _
  %s6 = ssub.s32 1, %s4
  %s7 = scalar_select 0, %s6, %s4
  $region1: #{tpu_custom_call.1} parent=0
    #allocation3 [shape = 'u8[57344]{0}', space=vmem, size = 0xe000, scoped, tag = 'input window, operand 0']
    #allocation4 [shape = 's32[2]{0}', space=sflag, size = 0x8, scoped, tag = 'scoped memory for tpu_custom_call.1']
    #allocation5 [shape = 's32[2]{0}', space=sflag, size = 0x8, scoped, tag = 'scoped memory for tpu_custom_call.1']
    #allocation6 [shape = 'u8[65536]{0}', space=vmem, size = 0x10000, scoped, tag = 'input window, operand 1']
    #allocation7 [shape = 's32[2]{0}', space=sflag, size = 0x8, scoped, tag = 'scoped memory for tpu_custom_call.1']
    #allocation8 [shape = 'u8[114688]{0}', space=vmem, size = 0x1c000, scoped, tag = 'output window, operand 0']
    %8 = vsyncpa [#allocation4], 0
    %s9 = scalar_lea.sflag [#allocation4], 1
    %10 = vsyncpa %s9, 0
    %11 = vsyncpa [#allocation7], 0
    %s12 = scalar_lea.sflag [#allocation7], 1
    %13 = vsyncpa %s12, 0
    %14 = vsyncpa [#allocation5], 0
    %s15 = scalar_lea.sflag [#allocation5], 1
    %16 = vsyncpa %s15, 0
    loop: start=0, step=1, limit=6
    $region2: #{tpu_custom_call.1} parent=1 // loop_pre_header
      _
    $region3: #{tpu_custom_call.1} parent=1 // loop_header
      %s18 = sphi 0, %s22
      %p19 = scmp.ge.s32.totalorder %s18, 6
      %s25 = sphi 0, %s37
      %s26 = sphi 0, %s33
      %s27 = sphi 0, %s25
      %s28 = sphi 0, %s26
      %s29 = sphi 0, %s27
      %s30 = sphi 0, %s28
      %s42 = sphi 0, %s44
      %s45 = sphi 0, %s42
      %s46 = sphi 0, %s45
      %s62 = sphi 0, %s46
      %s68 = sphi 0, %s70
      %s71 = sphi 0, %s68
      %s72 = sphi 0, %s71
      %s88 = sphi 0, %s72
      %s92 = sphi 0, %s92
      %s94 = sphi 0, %s92
      %s95 = sphi 0, %s94
      %s109 = sphi 0, %s95
      %s115 = sphi 0, %s117
      %s118 = sphi 0, %s115
      %s119 = sphi 0, %s118
      %s135 = sphi 0, %s119
    $region4: #{tpu_custom_call.1} parent=1 // loop_header_branch
      %21 = sbr.rel (%p19) target = $region8
    $region5: #{tpu_custom_call.1} parent=1 // loop_body
      %s23 = ssub.s32 %s18, 1
      %s24 = ssub.s32 %s18, 2
      %s31 = sadd.s32 1, %s26
      %p32 = scmp.ge.s32.totalorder %s31, 2
      %s33 = scalar_select %p32, 0, %s31
      %s34 = sadd.s32 1, %s25
      %s35 = scalar_select %p32, %s34, %s25
      %p36 = scmp.ge.s32.totalorder %s35, 2
      %s37 = scalar_select %p36, 0, %s35
      %s38 = ssub.s32 %s25, %s37
      %s39 = ssub.s32 %s26, %s33
      %s40 = sor.u32 %s38, %s39
      %p41 = scmp.eq.s32.totalorder %s40, 0
      %s43 = sadd.s32 %s42, 1
      %s44 = scalar_select %p41, %s42, %s43
      %p47 = pneg %p41
      %p48 = scmp.eq.s32.totalorder %s18, 3
      %p49 = por %p47, %p48
      %p50 = scmp.ne.s32.totalorder %s42, %s45
      %p51 = scmp.eq.s32.totalorder %s18, 0
      %p52 = por %p50, %p51
      %p53 = scmp.ne.s32.totalorder %s42, %s45
      %p54 = scmp.eq.s32.totalorder %s23, 3
      %p55 = por %p53, %p54
      %p56 = scmp.ne.s32.totalorder %s45, %s46
      %p57 = scmp.eq.s32.totalorder %s23, 0
      %p58 = por %p56, %p57
      %p59 = scmp.ne.s32.totalorder %s45, %s46
      %p60 = scmp.eq.s32.totalorder %s24, 3
      %p61 = por %p59, %p60
      %p63 = scmp.ne.s32.totalorder %s46, %s62
      %p64 = scmp.eq.s32.totalorder %s24, 0
      %p65 = por %p63, %p64
      %s66 = ssub.s32 %s26, %s33
      %p67 = scmp.eq.s32.totalorder %s66, 0
      %s69 = sadd.s32 %s68, 1
      %s70 = scalar_select %p67, %s68, %s69
      %p73 = pneg %p67
      %p74 = scmp.eq.s32.totalorder %s18, 3
      %p75 = por %p73, %p74
      %p76 = scmp.ne.s32.totalorder %s68, %s71
      %p77 = scmp.eq.s32.totalorder %s18, 0
      %p78 = por %p76, %p77
      %p79 = scmp.ne.s32.totalorder %s68, %s71
      %p80 = scmp.eq.s32.totalorder %s23, 3
      %p81 = por %p79, %p80
      %p82 = scmp.ne.s32.totalorder %s71, %s72
      %p83 = scmp.eq.s32.totalorder %s23, 0
      %p84 = por %p82, %p83
      %p85 = scmp.ne.s32.totalorder %s71, %s72
      %p86 = scmp.eq.s32.totalorder %s24, 3
      %p87 = por %p85, %p86
      %p89 = scmp.ne.s32.totalorder %s72, %s88
      %p90 = scmp.eq.s32.totalorder %s24, 0
      %p91 = por %p89, %p90
      %s93 = sadd.s32 %s92, 1
      %p96 = scmp.eq.s32.totalorder %s18, 3
      %p97 = scmp.ne.s32.totalorder %s92, %s94
      %p98 = scmp.eq.s32.totalorder %s18, 0
      %p99 = por %p97, %p98
      %p100 = scmp.ne.s32.totalorder %s92, %s94
      %p101 = scmp.eq.s32.totalorder %s23, 3
      %p102 = por %p100, %p101
      %p103 = scmp.ne.s32.totalorder %s94, %s95
      %p104 = scmp.eq.s32.totalorder %s23, 0
      %p105 = por %p103, %p104
      %p106 = scmp.ne.s32.totalorder %s94, %s95
      %p107 = scmp.eq.s32.totalorder %s24, 3
      %p108 = por %p106, %p107
      %p110 = scmp.ne.s32.totalorder %s95, %s109
      %p111 = scmp.eq.s32.totalorder %s24, 0
      %p112 = por %p110, %p111
      %s113 = ssub.s32 %s25, %s37
      %p114 = scmp.eq.s32.totalorder %s113, 0
      %s116 = sadd.s32 %s115, 1
      %s117 = scalar_select %p114, %s115, %s116
      %p120 = pneg %p114
      %p121 = scmp.eq.s32.totalorder %s18, 3
      %p122 = por %p120, %p121
      %p123 = scmp.ne.s32.totalorder %s115, %s118
      %p124 = scmp.eq.s32.totalorder %s18, 0
      %p125 = por %p123, %p124
      %p126 = scmp.ne.s32.totalorder %s115, %s118
      %p127 = scmp.eq.s32.totalorder %s23, 3
      %p128 = por %p126, %p127
      %p129 = scmp.ne.s32.totalorder %s118, %s119
      %p130 = scmp.eq.s32.totalorder %s23, 0
      %p131 = por %p129, %p130
      %p132 = scmp.ne.s32.totalorder %s118, %s119
      %p133 = scmp.eq.s32.totalorder %s24, 3
      %p134 = por %p132, %p133
      %p136 = scmp.ne.s32.totalorder %s119, %s135
      %p137 = scmp.eq.s32.totalorder %s24, 0
      %p138 = por %p136, %p137
      %p139 = scmp.le.s32.totalorder 1, %s18
      %p140 = scmp.lt.s32.totalorder %s18, 5
      %p141 = pnand %p139, %p140
      %p142 = pneg %p141
      // Predicated region
      $region9: #{tpu_custom_call.1} parent=5 // pred_check
        _
      $region10: #{tpu_custom_call.1} parent=5 // pred_check_branch
        %144 = sbr.rel (%p141) target = $region12
      $region11: #{tpu_custom_call.1} parent=5 // pred_region
        %s145 = ssub.s32 %s18, 1
        // Predicated region
        $region13: #{tpu_custom_call.1} parent=11 // pred_check
          %p146 = pneg %p105
        $region14: #{tpu_custom_call.1} parent=11 // pred_check_branch
          %148 = sbr.rel (%p146) target = $region16
        $region15: #{tpu_custom_call.1} parent=11 // pred_region
          _
        $region16: #{tpu_custom_call.1} parent=11 // pred_fallthru
          _
      $region12: #{tpu_custom_call.1} parent=5 // pred_fallthru
        _
      %p149 = scmp.lt.s32.totalorder %s18, 4
      // Predicated region
      $region17: #{tpu_custom_call.1} parent=5 // pred_check
        %p150 = pneg %p149
      $region18: #{tpu_custom_call.1} parent=5 // pred_check_branch
        %152 = sbr.rel (%p150) target = $region20
      $region19: #{tpu_custom_call.1} parent=5 // pred_region
        // Predicated region
        $region21: #{tpu_custom_call.1} parent=19 // pred_check
          %p153 = pneg %p52
        $region22: #{tpu_custom_call.1} parent=19 // pred_check_branch
          %155 = sbr.rel (%p153) target = $region24
        $region23: #{tpu_custom_call.1} parent=19 // pred_region
          %s156 = sand.u32 %s42, 1
          %s157 = scalar_lea.sflag [#allocation4], %s156
          %s158 = sand.u32 %s42, 1
          %s159 = smul.addr %s158, 56
          %s160 = scalar_lea.vmem [#allocation3], %s159
          %s161 = smul.u32 14, %s25
          %163 = vsyncadd %s157, 0
          %s164 = smul.addr %s161, 2
          %s165 = sadd.s32 %s26, %s164
          %s166 = smul.addr %s165, 4
          %s167 = scalar_lea.hbm %s0, %s166
          %s168 = sshll.u32 %s167, 4
          %s169 = int_to_ptr.hbm [resolvable:$true] %s168
          %s170 = sshll.u32 %s160, 4
          %s171 = int_to_ptr.vmem [resolvable:$true] %s170
          %176 = dma.hbm_to_vmem [thread:$0]  %s169, 896, %s171, %s157, 128, 64, 4
        $region24: #{tpu_custom_call.1} parent=19 // pred_fallthru
          _
        // Predicated region
        $region25: #{tpu_custom_call.1} parent=19 // pred_check
          %p177 = pneg %p78
        $region26: #{tpu_custom_call.1} parent=19 // pred_check_branch
          %179 = sbr.rel (%p177) target = $region28
        $region27: #{tpu_custom_call.1} parent=19 // pred_region
          %s180 = sand.u32 %s68, 1
          %s181 = scalar_lea.sflag [#allocation7], %s180
          %s182 = sand.u32 %s68, 1
          %s183 = smul.addr %s182, 64
          %s184 = scalar_lea.vmem [#allocation6], %s183
          %s185 = smul.u32 16, %s26
          %187 = vsyncadd %s181, 0
          %s188 = smul.addr %s185, 4
          %s189 = scalar_lea.hbm %s1, %s188
          %s190 = sshll.u32 %s189, 4
          %s191 = int_to_ptr.hbm [resolvable:$true] %s190
          %s192 = sshll.u32 %s184, 4
          %s193 = int_to_ptr.vmem [resolvable:$true] %s192
          %198 = dma.hbm_to_vmem [thread:$0]  %s191, 1024, %s193, %s181, 64, 64, 4
        $region28: #{tpu_custom_call.1} parent=19 // pred_fallthru
          _
      $region20: #{tpu_custom_call.1} parent=5 // pred_fallthru
        _
      %p199 = scmp.le.s32.totalorder 1, %s18
      %p200 = scmp.lt.s32.totalorder %s18, 5
      %p201 = pnand %p199, %p200
      %p202 = pneg %p201
      // Predicated region
      $region29: #{tpu_custom_call.1} parent=5 // pred_check
        _
      $region30: #{tpu_custom_call.1} parent=5 // pred_check_branch
        %204 = sbr.rel (%p201) target = $region32
      $region31: #{tpu_custom_call.1} parent=5 // pred_region
        %s205 = ssub.s32 %s18, 1
        %s206 = sand.u32 %s45, 1
        %s207 = scalar_lea.sflag [#allocation4], %s206
        %s208 = sand.u32 %s45, 1
        %s209 = smul.addr %s208, 56
        %s210 = scalar_lea.vmem [#allocation3], %s209
        // Predicated region
        $region33: #{tpu_custom_call.1} parent=31 // pred_check
          %p211 = pneg %p58
        $region34: #{tpu_custom_call.1} parent=31 // pred_check_branch
          %213 = sbr.rel (%p211) target = $region36
        $region35: #{tpu_custom_call.1} parent=31 // pred_region
          %215 = dma.done %s207, 896
        $region36: #{tpu_custom_call.1} parent=31 // pred_fallthru
          _
        %s216 = sand.u32 %s71, 1
        %s217 = scalar_lea.sflag [#allocation7], %s216
        %s218 = sand.u32 %s71, 1
        %s219 = smul.addr %s218, 64
        %s220 = scalar_lea.vmem [#allocation6], %s219
        // Predicated region
        $region37: #{tpu_custom_call.1} parent=31 // pred_check
          %p221 = pneg %p84
        $region38: #{tpu_custom_call.1} parent=31 // pred_check_branch
          %223 = sbr.rel (%p221) target = $region40
        $region39: #{tpu_custom_call.1} parent=31 // pred_region
          %225 = dma.done %s217, 1024
        $region40: #{tpu_custom_call.1} parent=31 // pred_fallthru
          _
        %s226 = sand.u32 %s45, 1
        %s227 = scalar_lea.sflag [#allocation4], %s226
        %s228 = sand.u32 %s45, 1
        %s229 = smul.addr %s228, 56
        %s230 = scalar_lea.vmem [#allocation3], %s229
        %p231 = pneg %p58
        %p232 = pneg %p55
        %s233 = sand.u32 %s71, 1
        %s234 = scalar_lea.sflag [#allocation7], %s233
        %s235 = sand.u32 %s71, 1
        %s236 = smul.addr %s235, 64
        %s237 = scalar_lea.vmem [#allocation6], %s236
        %p238 = pneg %p84
        %p239 = pneg %p81
        %p240 = pneg %p105
        %p241 = pneg %p102
        %p242 = pneg %p131
        %p243 = pneg %p128
        %s244 = sand.u32 %s118, 1
        %s245 = scalar_lea.sflag [#allocation5], %s244
        %s246 = sand.u32 %s118, 1
        %s247 = smul.addr %s246, 112
        %s248 = scalar_lea.vmem [#allocation8], %s247
        %s249 = smul.u32 14, %s27
        %s250 = smul.u32 16, %s28
        %s251 = smul.u32 14, %s27
        %p252 = scmp.eq.s32.totalorder %s28, 0
        // Predicated region
        $region41: #{tpu_custom_call.1} parent=31 // pred_check
          %p253 = pneg %p252
        $region42: #{tpu_custom_call.1} parent=31 // pred_check_branch
          %255 = sbr.rel (%p253) target = $region44
        $region43: #{tpu_custom_call.1} parent=31 // pred_region
          %256 = vst [vmem:[#allocation2] sm:$0xff] 0.0
          %257 = vst [vmem:[#allocation2 + $0x8] sm:$0xff] 0.0
          %258 = vst [vmem:[#allocation2 + $0x10] sm:$0xff] 0.0
          %259 = vst [vmem:[#allocation2 + $0x18] sm:$0xff] 0.0
          %260 = vst [vmem:[#allocation2 + $0x20] sm:$0xff] 0.0
          %261 = vst [vmem:[#allocation2 + $0x28] sm:$0xff] 0.0
          %262 = vst [vmem:[#allocation2 + $0x30] sm:$0xff] 0.0
          %263 = vst [vmem:[#allocation2 + $0x38] sm:$0xff] 0.0
          %264 = vst [vmem:[#allocation2 + $0x40] sm:$0xff] 0.0
          %265 = vst [vmem:[#allocation2 + $0x48] sm:$0xff] 0.0
          %266 = vst [vmem:[#allocation2 + $0x50] sm:$0xff] 0.0
          %267 = vst [vmem:[#allocation2 + $0x58] sm:$0xff] 0.0
          %268 = vst [vmem:[#allocation2 + $0x60] sm:$0xff] 0.0
          %269 = vst [vmem:[#allocation2 + $0x68] sm:$0xff] 0.0
        $region44: #{tpu_custom_call.1} parent=31 // pred_fallthru
          _
        %v270 = vld [vmem:[#allocation2] sm:$0xff]
        %v271 = vld [vmem:[#allocation2 + $0x8] sm:$0xff]
        %v272 = vld [vmem:[#allocation2 + $0x10] sm:$0xff]
        %v273 = vld [vmem:[#allocation2 + $0x18] sm:$0xff]
        %v274 = vld [vmem:[#allocation2 + $0x20] sm:$0xff]
        %v275 = vld [vmem:[#allocation2 + $0x28] sm:$0xff]
        %v276 = vld [vmem:[#allocation2 + $0x30] sm:$0xff]
        %v277 = vld [vmem:[#allocation2 + $0x38] sm:$0xff]
        %v278 = vld [vmem:[#allocation2 + $0x40] sm:$0xff]
        %v279 = vld [vmem:[#allocation2 + $0x48] sm:$0xff]
        %v280 = vld [vmem:[#allocation2 + $0x50] sm:$0xff]
        %v281 = vld [vmem:[#allocation2 + $0x58] sm:$0xff]
        %v282 = vld [vmem:[#allocation2 + $0x60] sm:$0xff]
        %v283 = vld [vmem:[#allocation2 + $0x68] sm:$0xff]
        %v284 = vld [vmem:[%s210] sm:$0xf]
        %v285 = vld [vmem:[%s210 + $0x4] sm:$0xf]
        %v286 = vld [vmem:[%s210 + $0x8] sm:$0xf]
        %v287 = vld [vmem:[%s210 + $0xc] sm:$0xf]
        %v288 = vld [vmem:[%s210 + $0x10] sm:$0xf]
        %v289 = vld [vmem:[%s210 + $0x14] sm:$0xf]
        %v290 = vld [vmem:[%s210 + $0x18] sm:$0xf]
        %v291 = vld [vmem:[%s210 + $0x1c] sm:$0xf]
        %v292 = vld [vmem:[%s210 + $0x20] sm:$0xf]
        %v293 = vld [vmem:[%s210 + $0x24] sm:$0xf]
        %v294 = vld [vmem:[%s210 + $0x28] sm:$0xf]
        %v295 = vld [vmem:[%s210 + $0x2c] sm:$0xf]
        %v296 = vld [vmem:[%s210 + $0x30] sm:$0xf]
        %v297 = vld [vmem:[%s210 + $0x34] sm:$0xf]
        %v298 = vld [vmem:[%s220] sm:$0xf]
        %v299 = vld [vmem:[%s220 + $0x4] sm:$0xf]
        %v300 = vld [vmem:[%s220 + $0x8] sm:$0xf]
        %v301 = vld [vmem:[%s220 + $0xc] sm:$0xf]
        %v302 = vld [vmem:[%s220 + $0x10] sm:$0xf]
        %v303 = vld [vmem:[%s220 + $0x14] sm:$0xf]
        %v304 = vld [vmem:[%s220 + $0x18] sm:$0xf]
        %v305 = vld [vmem:[%s220 + $0x1c] sm:$0xf]
        %v306 = vld [vmem:[%s220 + $0x20] sm:$0xf]
        %v307 = vld [vmem:[%s220 + $0x24] sm:$0xf]
        %v308 = vld [vmem:[%s220 + $0x28] sm:$0xf]
        %v309 = vld [vmem:[%s220 + $0x2c] sm:$0xf]
        %v310 = vld [vmem:[%s220 + $0x30] sm:$0xf]
        %v311 = vld [vmem:[%s220 + $0x34] sm:$0xf]
        %v312 = vld [vmem:[%s220 + $0x38] sm:$0xf]
        %v313 = vld [vmem:[%s220 + $0x3c] sm:$0xf]
        %v328 = vunpack.c.l.b16 %v284
        %v329 = vunpack.c.l.b16 %v285
        %v330 = vunpack.c.l.b16 %v286
        %v331 = vunpack.c.l.b16 %v287
        %v332 = vunpack.c.l.b16 %v288
        %v333 = vunpack.c.l.b16 %v289
        %v334 = vunpack.c.l.b16 %v290
        %v335 = vunpack.c.l.b16 %v291
        %v336 = vunpack.c.l.b16 %v292
        %v337 = vunpack.c.l.b16 %v293
        %v338 = vunpack.c.l.b16 %v294
        %v339 = vunpack.c.l.b16 %v295
        %v340 = vunpack.c.l.b16 %v296
        %v341 = vunpack.c.l.b16 %v297
        %v342 = vpack.c.b16 %v329, %v328
        %v343 = vpack.c.b16 %v331, %v330
        %v344 = vpack.c.b16 %v333, %v332
        %v345 = vpack.c.b16 %v335, %v334
        %v346 = vpack.c.b16 %v337, %v336
        %v347 = vpack.c.b16 %v339, %v338
        %v348 = vpack.c.b16 %v341, %v340
        %v372 = vunpack.c.l.b16 %v298
        %v373 = vunpack.c.l.b16 %v299
        %v374 = vunpack.c.l.b16 %v300
        %v375 = vunpack.c.l.b16 %v301
        %v376 = vunpack.c.l.b16 %v302
        %v377 = vunpack.c.l.b16 %v303
        %v378 = vunpack.c.l.b16 %v304
        %v379 = vunpack.c.l.b16 %v305
        %v380 = vunpack.c.l.b16 %v306
        %v381 = vunpack.c.l.b16 %v307
        %v382 = vunpack.c.l.b16 %v308
        %v383 = vunpack.c.l.b16 %v309
        %v384 = vunpack.c.l.b16 %v310
        %v385 = vunpack.c.l.b16 %v311
        %v386 = vunpack.c.l.b16 %v312
        %v387 = vunpack.c.l.b16 %v313
        %v388 = vpack.c.b16 %v373, %v372
        %v389 = vpack.c.b16 %v375, %v374
        %v390 = vpack.c.b16 %v377, %v376
        %v391 = vpack.c.b16 %v379, %v378
        %v392 = vpack.c.b16 %v381, %v380
        %v393 = vpack.c.b16 %v383, %v382
        %v394 = vpack.c.b16 %v385, %v384
        %v395 = vpack.c.b16 %v387, %v386
        %404 = vmatpush.bf16.msra.mxu0 %v395
        %405 = vmatpush.bf16.msra.mxu0 %v394
        %406 = vmatpush.bf16.msra.mxu0 %v393
        %407 = vmatpush.bf16.msra.mxu0 %v392
        %408 = vmatpush.bf16.msra.mxu0 %v391
        %409 = vmatpush.bf16.msra.mxu0 %v390
        %410 = vmatpush.bf16.msra.mxu0 %v389
        %411 = vmatpush.bf16.msra.mxu0 %v388
        %412 = vmatmul.bf16.gmra.mxu0 %v342
        %v413 = vpop.f32.mrf.mxu0
        %v414 = vadd.f32 0.0, %v413
        %v415 = vpop.f32.mrf.mxu0
        %v416 = vadd.f32 0.0, %v415
        %417 = vmatmul.bf16.gmra.mxu0 %v343
        %v418 = vpop.f32.mrf.mxu0
        %v419 = vadd.f32 0.0, %v418
        %v420 = vpop.f32.mrf.mxu0
        %v421 = vadd.f32 0.0, %v420
        %422 = vmatmul.bf16.gmra.mxu0 %v344
        %v423 = vpop.f32.mrf.mxu0
        %v424 = vadd.f32 0.0, %v423
        %v425 = vpop.f32.mrf.mxu0
        %v426 = vadd.f32 0.0, %v425
        %427 = vmatmul.bf16.gmra.mxu0 %v345
        %v428 = vpop.f32.mrf.mxu0
        %v429 = vadd.f32 0.0, %v428
        %v430 = vpop.f32.mrf.mxu0
        %v431 = vadd.f32 0.0, %v430
        %432 = vmatmul.bf16.gmra.mxu0 %v346
        %v433 = vpop.f32.mrf.mxu0
        %v434 = vadd.f32 0.0, %v433
        %v435 = vpop.f32.mrf.mxu0
        %v436 = vadd.f32 0.0, %v435
        %437 = vmatmul.bf16.gmra.mxu0 %v347
        %v438 = vpop.f32.mrf.mxu0
        %v439 = vadd.f32 0.0, %v438
        %v440 = vpop.f32.mrf.mxu0
        %v441 = vadd.f32 0.0, %v440
        %442 = vmatmul.bf16.gmra.mxu0 %v348
        %v443 = vpop.f32.mrf.mxu0
        %v444 = vadd.f32 0.0, %v443
        %v445 = vpop.f32.mrf.mxu0
        %v446 = vadd.f32 0.0, %v445
        %447 = vdwg.mxu0
        %v448 = vadd.f32 %v270, %v414
        %v449 = vadd.f32 %v271, %v416
        %v450 = vadd.f32 %v272, %v419
        %v451 = vadd.f32 %v273, %v421
        %v452 = vadd.f32 %v274, %v424
        %v453 = vadd.f32 %v275, %v426
        %v454 = vadd.f32 %v276, %v429
        %v455 = vadd.f32 %v277, %v431
        %v456 = vadd.f32 %v278, %v434
        %v457 = vadd.f32 %v279, %v436
        %v458 = vadd.f32 %v280, %v439
        %v459 = vadd.f32 %v281, %v441
        %v460 = vadd.f32 %v282, %v444
        %v461 = vadd.f32 %v283, %v446
        %462 = vst [vmem:[#allocation2] sm:$0xff] %v448
        %463 = vst [vmem:[#allocation2 + $0x8] sm:$0xff] %v449
        %464 = vst [vmem:[#allocation2 + $0x10] sm:$0xff] %v450
        %465 = vst [vmem:[#allocation2 + $0x18] sm:$0xff] %v451
        %466 = vst [vmem:[#allocation2 + $0x20] sm:$0xff] %v452
        %467 = vst [vmem:[#allocation2 + $0x28] sm:$0xff] %v453
        %468 = vst [vmem:[#allocation2 + $0x30] sm:$0xff] %v454
        %469 = vst [vmem:[#allocation2 + $0x38] sm:$0xff] %v455
        %470 = vst [vmem:[#allocation2 + $0x40] sm:$0xff] %v456
        %471 = vst [vmem:[#allocation2 + $0x48] sm:$0xff] %v457
        %472 = vst [vmem:[#allocation2 + $0x50] sm:$0xff] %v458
        %473 = vst [vmem:[#allocation2 + $0x58] sm:$0xff] %v459
        %474 = vst [vmem:[#allocation2 + $0x60] sm:$0xff] %v460
        %475 = vst [vmem:[#allocation2 + $0x68] sm:$0xff] %v461
        %p476 = scmp.eq.s32.totalorder %s28, 1
        // Predicated region
        $region45: #{tpu_custom_call.1} parent=31 // pred_check
          %p477 = pneg %p476
        $region46: #{tpu_custom_call.1} parent=31 // pred_check_branch
          %479 = sbr.rel (%p477) target = $region48
        $region47: #{tpu_custom_call.1} parent=31 // pred_region
          %v480 = vld [vmem:[#allocation2] sm:$0xff]
          %v481 = vld [vmem:[#allocation2 + $0x8] sm:$0xff]
          %v482 = vld [vmem:[#allocation2 + $0x10] sm:$0xff]
          %v483 = vld [vmem:[#allocation2 + $0x18] sm:$0xff]
          %v484 = vld [vmem:[#allocation2 + $0x20] sm:$0xff]
          %v485 = vld [vmem:[#allocation2 + $0x28] sm:$0xff]
          %v486 = vld [vmem:[#allocation2 + $0x30] sm:$0xff]
          %v487 = vld [vmem:[#allocation2 + $0x38] sm:$0xff]
          %v488 = vld [vmem:[#allocation2 + $0x40] sm:$0xff]
          %v489 = vld [vmem:[#allocation2 + $0x48] sm:$0xff]
          %v490 = vld [vmem:[#allocation2 + $0x50] sm:$0xff]
          %v491 = vld [vmem:[#allocation2 + $0x58] sm:$0xff]
          %v492 = vld [vmem:[#allocation2 + $0x60] sm:$0xff]
          %v493 = vld [vmem:[#allocation2 + $0x68] sm:$0xff]
          %v494 = vld [vmem:[%s2] sm:$0x1]
          %v496 = vperm.slane %v494, 0
          %v498 = vadd.f32 %v480, %v496
          %v499 = vadd.f32 %v481, %v496
          %v500 = vadd.f32 %v482, %v496
          %v501 = vadd.f32 %v483, %v496
          %v502 = vadd.f32 %v484, %v496
          %v503 = vadd.f32 %v485, %v496
          %v504 = vadd.f32 %v486, %v496
          %v505 = vadd.f32 %v487, %v496
          %v506 = vadd.f32 %v488, %v496
          %v507 = vadd.f32 %v489, %v496
          %v508 = vadd.f32 %v490, %v496
          %v509 = vadd.f32 %v491, %v496
          %v510 = vadd.f32 %v492, %v496
          %v511 = vadd.f32 %v493, %v496
          %512 = vst [vmem:[%s248] sm:$0xff] %v498
          %513 = vst [vmem:[%s248 + $0x8] sm:$0xff] %v499
          %514 = vst [vmem:[%s248 + $0x10] sm:$0xff] %v500
          %515 = vst [vmem:[%s248 + $0x18] sm:$0xff] %v501
          %516 = vst [vmem:[%s248 + $0x20] sm:$0xff] %v502
          %517 = vst [vmem:[%s248 + $0x28] sm:$0xff] %v503
          %518 = vst [vmem:[%s248 + $0x30] sm:$0xff] %v504
          %519 = vst [vmem:[%s248 + $0x38] sm:$0xff] %v505
          %520 = vst [vmem:[%s248 + $0x40] sm:$0xff] %v506
          %521 = vst [vmem:[%s248 + $0x48] sm:$0xff] %v507
          %522 = vst [vmem:[%s248 + $0x50] sm:$0xff] %v508
          %523 = vst [vmem:[%s248 + $0x58] sm:$0xff] %v509
          %524 = vst [vmem:[%s248 + $0x60] sm:$0xff] %v510
          %525 = vst [vmem:[%s248 + $0x68] sm:$0xff] %v511
        $region48: #{tpu_custom_call.1} parent=31 // pred_fallthru
          _
        %s526 = sand.u32 %s118, 1
        %s527 = scalar_lea.sflag [#allocation5], %s526
        %s528 = sand.u32 %s118, 1
        %s529 = smul.addr %s528, 112
        %s530 = scalar_lea.vmem [#allocation8], %s529
        // Predicated region
        $region49: #{tpu_custom_call.1} parent=31 // pred_check
          %p531 = pneg %p128
        $region50: #{tpu_custom_call.1} parent=31 // pred_check_branch
          %533 = sbr.rel (%p531) target = $region52
        $region51: #{tpu_custom_call.1} parent=31 // pred_region
          %s534 = smul.u32 14, %s27
          %536 = vsyncadd %s527, 0
          %s537 = smul.addr %s534, 8
          %s538 = scalar_lea.hbm %s3, %s537
          %s539 = sshll.u32 %s530, 4
          %s540 = int_to_ptr.vmem [resolvable:$true] %s539
          %s541 = sshll.u32 %s538, 4
          %s542 = int_to_ptr.hbm [resolvable:$true] %s541
          %547 = dma.vmem_to_hbm [thread:$0]  %s540, 1792, %s542, %s527, 128, 128, 8
        $region52: #{tpu_custom_call.1} parent=31 // pred_fallthru
          _
      $region32: #{tpu_custom_call.1} parent=5 // pred_fallthru
        _
      %p548 = scmp.le.s32.totalorder 2, %s18
      // Predicated region
      $region53: #{tpu_custom_call.1} parent=5 // pred_check
        %p549 = pneg %p548
      $region54: #{tpu_custom_call.1} parent=5 // pred_check_branch
        %551 = sbr.rel (%p549) target = $region56
      $region55: #{tpu_custom_call.1} parent=5 // pred_region
        %s552 = ssub.s32 %s18, 2
        // Predicated region
        $region57: #{tpu_custom_call.1} parent=55 // pred_check
          %p553 = pneg %p134
        $region58: #{tpu_custom_call.1} parent=55 // pred_check_branch
          %555 = sbr.rel (%p553) target = $region60
        $region59: #{tpu_custom_call.1} parent=55 // pred_region
          %s556 = sand.u32 %s119, 1
          %s557 = scalar_lea.sflag [#allocation5], %s556
          %s558 = sand.u32 %s119, 1
          %s559 = smul.addr %s558, 112
          %s560 = scalar_lea.vmem [#allocation8], %s559
          %562 = dma.done %s557, 1792
        $region60: #{tpu_custom_call.1} parent=55 // pred_fallthru
          _
      $region56: #{tpu_custom_call.1} parent=5 // pred_fallthru
        _
    $region6: #{tpu_custom_call.1} parent=1 // loop_footer
      %s22 = sadd.s32 1, %s18
    $region7: #{tpu_custom_call.1} parent=1 // loop_footer_branch
      %17 = sbr.rel target = $region3
    $region8: #{tpu_custom_call.1} parent=1 // loop_exit
      _
    %563 = vsyncpa [#allocation4], 1
    %s564 = scalar_lea.sflag [#allocation4], 1
    %565 = vsyncpa %s564, 1
    %566 = vsyncpa [#allocation7], 1
    %s567 = scalar_lea.sflag [#allocation7], 1
    %568 = vsyncpa %s567, 1
    %569 = vsyncpa [#allocation5], 1
    %s570 = scalar_lea.sflag [#allocation5], 1
    %571 = vsyncpa %s570, 1

</llo_original>
